<compile_context>
chip_gen: v7x
topology: tpu7x:2x2x1
jax: 0.10.0
libtpu: 0.0.40
codegen_flags: <defaults>
</compile_context>

<pallas_src>
import functools

import jax
import jax.numpy as jnp
from jax.experimental import pallas as pl
from jax.experimental.pallas import tpu as pltpu


_LANE = 128
# Explicit scoped-VMEM budget: safe on v5e/v6e (128 MiB physical) and v7x
# (64 MiB physical), with headroom above what the tile caps below can request.
_VMEM_LIMIT_BYTES = 48 * 1024 * 1024
# Target ~4 MiB of (padded) input HBM traffic per grid step: covers the
# ~0.35 us per-step overhead even at v7x's ~3.2 TB/s per-TC HBM bandwidth.
_STEP_BYTES_TARGET = 4 * 1024 * 1024
# Per-step (input + output) padded VMEM bytes; x2 double-buffering stays well
# under _VMEM_LIMIT_BYTES.
_STEP_VMEM_BUDGET = 16 * 1024 * 1024


def _round_up(x: int, m: int) -> int:
    return ((x + m - 1) // m) * m


def _sublane_multiple(dtype) -> int:
    # Sub-32-bit dtypes pack along sublanes: (8,128) f32, (16,128) bf16, (32,128) i8.
    return {4: 8, 2: 16, 1: 32}.get(jnp.dtype(dtype).itemsize, 8)


# ---------------------------------------------------------------------------
# Kernels: pure copies.  The slice is either a static in-kernel window (general
# path) or folded into the input BlockSpec's lane-block offset (fast path).
# ---------------------------------------------------------------------------
def _slice2d_kernel(x_ref, o_ref, *, start, out_len):
    o_ref[...] = x_ref[:, pl.ds(start, out_len)]


def _slice3d_kernel(x_ref, o_ref, *, start, out_len):
    o_ref[...] = x_ref[:, :, pl.ds(start, out_len)]


def _copy_kernel(x_ref, o_ref):
    o_ref[...] = x_ref[...]


def _choose_tile(count: int, in_unit_bytes: int, out_unit_bytes: int,
                 align: int, force_multi: bool) -> int:
    """Tile size along the row/batch grid axis.

    count           : number of units (rows or batch slices) along the axis.
    in/out_unit_bytes: padded VMEM bytes of one unit in the input/output block.
    align           : required tile multiple (dtype sublane multiple for rows, 1 for batches).
    force_multi     : prefer >= 2 grid steps (v7x megacore) when possible.
    """
    t = max(1, _STEP_BYTES_TARGET // max(1, in_unit_bytes))
    t_cap = max(1, _STEP_VMEM_BUDGET // max(1, in_unit_bytes + out_unit_bytes))
    t = min(t, t_cap, count)
    if force_multi and t >= count and count > align:
        t = -(-count // 2)                      # ceil(count / 2): >= 2 grid steps
    if t < count:
        t = max(align, (t // align) * align)    # keep partial tiles sublane-dense
        t = min(t, count)
    return max(1, t)


@functools.partial(jax.jit, static_argnames=("number", "greater"))
def index_forward(x, *, number: int, greater: bool = True):
    """Pallas implementation of Index.forward: x[..., number:] or x[..., :number]."""
    L = x.shape[-1]
    sl = slice(number, None) if greater else slice(None, number)
    start, stop, _ = sl.indices(L)              # NumPy/PyTorch negative-index & clamping
    out_len = max(stop - start, 0)
    out_shape_full = x.shape[:-1] + (out_len,)

    if out_len == 0 or 0 in x.shape:            # degenerate: empty output
        return jnp.zeros(out_shape_full, x.dtype)
    if out_len == L:                            # full slice: identity
        return x

    itemsize = jnp.dtype(x.dtype).itemsize
    sublane = _sublane_multiple(x.dtype)

    # Lane-aligned fast path: DMA only the sliced window, dense vld/vst.
    lane_tile = 0
    if start % _LANE == 0 and out_len % _LANE == 0:
        lane_tile = _LANE
        for cand in (1024, 512, 256):
            if out_len % cand == 0 and start % cand == 0:
                lane_tile = cand
                break
    n_lane_blocks = out_len // lane_tile if lane_tile else 1

    # Collapse leading dims only when it is a metadata-only reshape.
    H = x.shape[-2] if x.ndim >= 2 else 1
    lead = 1
    for d in x.shape[:-2]:
        lead *= d
    collapse_ok = (x.ndim <= 2) or (lead == 1) or (H % sublane == 0)

    def _params(sem):
        return pltpu.CompilerParams(dimension_semantics=sem,
                                    vmem_limit_bytes=_VMEM_LIMIT_BYTES)

    if collapse_ok:
        rows = 1
        for d in x.shape[:-1]:
            rows *= d
        x2 = x.reshape(rows, L)

        if lane_tile:
            unit = lane_tile * itemsize
            tile = _choose_tile(rows, unit, unit, sublane,
                                force_multi=(n_lane_blocks < 2))
            start_blk = start // lane_tile
            out = pl.pallas_call(
                _copy_kernel,
                out_shape=jax.ShapeDtypeStruct((rows, out_len), x.dtype),
                grid=(pl.cdiv(rows, tile), n_lane_blocks),
                in_specs=[pl.BlockSpec((tile, lane_tile),
                                       lambda i, j: (i, j + start_blk))],
                out_specs=pl.BlockSpec((tile, lane_tile), lambda i, j: (i, j)),
                compiler_params=_params(("parallel", "parallel")),
                cost_estimate=pl.CostEstimate(
                    flops=0, transcendentals=0,
                    bytes_accessed=2 * rows * out_len * itemsize),
            )(x2)
        else:
            in_unit = _round_up(L, _LANE) * itemsize
            out_unit = _round_up(out_len, _LANE) * itemsize
            tile = _choose_tile(rows, in_unit, out_unit, sublane, force_multi=True)
            kernel = functools.partial(_slice2d_kernel, start=start, out_len=out_len)
            out = pl.pallas_call(
                kernel,
                out_shape=jax.ShapeDtypeStruct((rows, out_len), x.dtype),
                grid=(pl.cdiv(rows, tile),),
                in_specs=[pl.BlockSpec((tile, L), lambda i: (i, 0))],
                out_specs=pl.BlockSpec((tile, out_len), lambda i: (i, 0)),
                compiler_params=_params(("parallel",)),
                cost_estimate=pl.CostEstimate(
                    flops=0, transcendentals=0,
                    bytes_accessed=rows * (L + out_len) * itemsize),
            )(x2)
        return out.reshape(out_shape_full)

    # 3-D path: (lead, H, L) view is always metadata-only; tile the batch axis.
    x3 = x.reshape(lead, H, L)
    h_pad = _round_up(H, sublane)

    if lane_tile:
        unit = h_pad * lane_tile * itemsize
        tile = _choose_tile(lead, unit, unit, 1, force_multi=(n_lane_blocks < 2))
        start_blk = start // lane_tile
        out = pl.pallas_call(
            _copy_kernel,
            out_shape=jax.ShapeDtypeStruct((lead, H, out_len), x.dtype),
            grid=(pl.cdiv(lead, tile), n_lane_blocks),
            in_specs=[pl.BlockSpec((tile, H, lane_tile),
                                   lambda i, j: (i, 0, j + start_blk))],
            out_specs=pl.BlockSpec((tile, H, lane_tile), lambda i, j: (i, 0, j)),
            compiler_params=_params(("parallel", "parallel")),
            cost_estimate=pl.CostEstimate(
                flops=0, transcendentals=0,
                bytes_accessed=2 * lead * H * out_len * itemsize),
        )(x3)
    else:
        in_unit = h_pad * _round_up(L, _LANE) * itemsize
        out_unit = h_pad * _round_up(out_len, _LANE) * itemsize
        tile = _choose_tile(lead, in_unit, out_unit, 1, force_multi=True)
        kernel = functools.partial(_slice3d_kernel, start=start, out_len=out_len)
        out = pl.pallas_call(
            kernel,
            out_shape=jax.ShapeDtypeStruct((lead, H, out_len), x.dtype),
            grid=(pl.cdiv(lead, tile),),
            in_specs=[pl.BlockSpec((tile, H, L), lambda i: (i, 0, 0))],
            out_specs=pl.BlockSpec((tile, H, out_len), lambda i: (i, 0, 0)),
            compiler_params=_params(("parallel",)),
            cost_estimate=pl.CostEstimate(
                flops=0, transcendentals=0,
                bytes_accessed=lead * H * (L + out_len) * itemsize),
        )(x3)
    return out.reshape(out_shape_full)


if __name__ == "__main__":
    key = jax.random.PRNGKey(0)
    x = jax.random.normal(key, (2, 4, 16, 16), dtype=jnp.float32)

    # greater=True, number=4  ->  x[..., 4:]   (2-D general path)
    out_g = index_forward(x, number=4, greater=True)
    jax.block_until_ready(out_g)
    ref_g = x[..., 4:]
    assert out_g.shape == ref_g.shape == (2, 4, 16, 12)
    assert jnp.array_equal(out_g, ref_g)

    # greater=False, number=-5  ->  x[..., :-5]
    out_l = index_forward(x, number=-5, greater=False)
    jax.block_until_ready(out_l)
    ref_l = x[..., :-5]
    assert out_l.shape == ref_l.shape == (2, 4, 16, 11)
    assert jnp.array_equal(out_l, ref_l)

    # greater=True, number=-3  ->  x[..., -3:]
    out_n = index_forward(x, number=-3, greater=True)
    jax.block_until_ready(out_n)
    ref_n = x[..., -3:]
    assert out_n.shape == ref_n.shape == (2, 4, 16, 3)
    assert jnp.array_equal(out_n, ref_n)

    # Lane-aligned fast path: start=128, out_len=128 (windowed DMA, dense vst).
    xa = jax.random.normal(jax.random.PRNGKey(1), (2, 8, 256), dtype=jnp.float32)
    out_a = index_forward(xa, number=128, greater=True)
    jax.block_until_ready(out_a)
    ref_a = xa[..., 128:]
    assert out_a.shape == ref_a.shape == (2, 8, 128)
    assert jnp.array_equal(out_a, ref_a)

    # Non-collapsible second-minor dim (H=6 not a sublane multiple) -> 3-D path.
    xb = jax.random.normal(jax.random.PRNGKey(2), (2, 4, 6, 16), dtype=jnp.float32)
    out_b = index_forward(xb, number=4, greater=True)
    jax.block_until_ready(out_b)
    ref_b = xb[..., 4:]
    assert out_b.shape == ref_b.shape == (2, 4, 6, 12)
    assert jnp.array_equal(out_b, ref_b)

    print("KERNEL_OK")
</pallas_src>

<mosaic_0001>
module attributes {stable_mosaic.version = 11 : i64} {
  func.func @_slice2d_kernel(%arg0: i32, %arg1: memref<64x16xf32, #tpu.memory_space<vmem>>, %arg2: memref<64x12xf32, #tpu.memory_space<vmem>>) attributes {dimension_semantics = [#tpu.dimension_semantics<parallel>], iteration_bounds = array<i64: 2>, scalar_prefetch = 0 : i64, scratch_operands = 0 : i64, tpu.core_type = #tpu.core_type<tc>, window_params = [{transform_indices = @transform_0, window_bounds = array<i64: 64, 16>}, {transform_indices = @transform_1, window_bounds = array<i64: 64, 12>}]} {
    %c0 = arith.constant 0 : index
    %c4 = arith.constant 4 : index
    %0 = vector.load %arg1[%c0, %c4] : memref<64x16xf32, #tpu.memory_space<vmem>>, vector<64x12xf32>
    %c0_0 = arith.constant 0 : index
    %c0_1 = arith.constant 0 : index
    %1 = vector.load %arg2[%c0_0, %c0_1] : memref<64x12xf32, #tpu.memory_space<vmem>>, vector<64x12xf32>
    tpu.vector_store %arg2[%c0_0, %c0_1], %0 {strides = array<i32>} : memref<64x12xf32, #tpu.memory_space<vmem>>, vector<64x12xf32>,
    return
  }
  func.func @transform_0(%arg0: i32) -> (i32, i32) {
    %c0_i32 = arith.constant 0 : i32
    %c0_i32_0 = arith.constant 0 : i32
    return %arg0, %c0_i32 : i32, i32
  }
  func.func @transform_1(%arg0: i32) -> (i32, i32) {
    %c0_i32 = arith.constant 0 : i32
    %c0_i32_0 = arith.constant 0 : i32
    return %arg0, %c0_i32 : i32, i32
  }
}

</mosaic_0001>

<llo_original>
// kernel: index_forward.1
$region0: #{index_forward.1}
  #allocation0 [shape = 'u32[]', space=smem, size = 0x4, offset = 0x4, fixed_abs, tag = 'smem constant byte address 0x4 - core index']
  #allocation1 [shape = 'u32[144,128]{1,0:T(1,128)}', space=vmem, size = 0x12000, scoped, tag = 'internal scratch']
  %s0 = inlined_call_operand.hbm [shape: f32[128,16], index: 0, kind: input, shape index: {}]
  %s1 = inlined_call_operand.vmem [shape: f32[128,12], index: 1, kind: output, shape index: {}]
  %s2 = sld [smem:[#allocation0]]
  $region41: #{index_forward.1} parent=0
    _
  %s4 = ssub.s32 1, %s2
  %s5 = scalar_select 0, %s4, %s2
  $region1: #{index_forward.1} parent=0
    #allocation2 [shape = 'u8[65536]{0}', space=vmem, size = 0x10000, scoped, tag = 'input window, operand 0']
    #allocation3 [shape = 's32[2]{0}', space=sflag, size = 0x8, scoped, tag = 'scoped memory for index_forward.1']
    %6 = vsyncpa [#allocation3], 0
    %s7 = scalar_lea.sflag [#allocation3], 1
    %8 = vsyncpa %s7, 0
    loop: start=0, step=1, limit=4
    $region2: #{index_forward.1} parent=1 // loop_pre_header
      _
    $region3: #{index_forward.1} parent=1 // loop_header
      %s10 = sphi 0, %s14
      %p11 = scmp.ge.s32.totalorder %s10, 4
      %s20 = sphi 0, %s22
      %s23 = sphi 0, %s20
      %s24 = sphi 0, %s23
      %s40 = sphi 0, %s24
      %s46 = sphi 0, %s48
      %s49 = sphi 0, %s46
      %s50 = sphi 0, %s49
      %s66 = sphi 0, %s50
    $region4: #{index_forward.1} parent=1 // loop_header_branch
      %13 = sbr.rel (%p11) target = $region8
    $region5: #{index_forward.1} parent=1 // loop_body
      %s15 = ssub.s32 %s10, 1
      %s16 = ssub.s32 %s10, 2
      %s17 = sadd.s32 %s10, 1
      %s18 = ssub.s32 %s10, %s17
      %p19 = scmp.eq.s32.totalorder %s18, 0
      %s21 = sadd.s32 %s20, 1
      %s22 = scalar_select %p19, %s20, %s21
      %p25 = pneg %p19
      %p26 = scmp.eq.s32.totalorder %s10, 1
      %p27 = por %p25, %p26
      %p28 = scmp.ne.s32.totalorder %s20, %s23
      %p29 = scmp.eq.s32.totalorder %s10, 0
      %p30 = por %p28, %p29
      %p31 = scmp.ne.s32.totalorder %s20, %s23
      %p32 = scmp.eq.s32.totalorder %s15, 1
      %p33 = por %p31, %p32
      %p34 = scmp.ne.s32.totalorder %s23, %s24
      %p35 = scmp.eq.s32.totalorder %s15, 0
      %p36 = por %p34, %p35
      %p37 = scmp.ne.s32.totalorder %s23, %s24
      %p38 = scmp.eq.s32.totalorder %s16, 1
      %p39 = por %p37, %p38
      %p41 = scmp.ne.s32.totalorder %s24, %s40
      %p42 = scmp.eq.s32.totalorder %s16, 0
      %p43 = por %p41, %p42
      %s44 = ssub.s32 %s10, %s17
      %p45 = scmp.eq.s32.totalorder %s44, 0
      %s47 = sadd.s32 %s46, 1
      %s48 = scalar_select %p45, %s46, %s47
      %p51 = pneg %p45
      %p52 = scmp.eq.s32.totalorder %s10, 1
      %p53 = por %p51, %p52
      %p54 = scmp.ne.s32.totalorder %s46, %s49
      %p55 = scmp.eq.s32.totalorder %s10, 0
      %p56 = por %p54, %p55
      %p57 = scmp.ne.s32.totalorder %s46, %s49
      %p58 = scmp.eq.s32.totalorder %s15, 1
      %p59 = por %p57, %p58
      %p60 = scmp.ne.s32.totalorder %s49, %s50
      %p61 = scmp.eq.s32.totalorder %s15, 0
      %p62 = por %p60, %p61
      %p63 = scmp.ne.s32.totalorder %s49, %s50
      %p64 = scmp.eq.s32.totalorder %s16, 1
      %p65 = por %p63, %p64
      %p67 = scmp.ne.s32.totalorder %s50, %s66
      %p68 = scmp.eq.s32.totalorder %s16, 0
      %p69 = por %p67, %p68
      %p70 = scmp.le.s32.totalorder 1, %s10
      %p71 = scmp.lt.s32.totalorder %s10, 3
      %p72 = pnand %p70, %p71
      %p73 = pneg %p72
      // Predicated region
      $region9: #{index_forward.1} parent=5 // pred_check
        _
      $region10: #{index_forward.1} parent=5 // pred_check_branch
        %75 = sbr.rel (%p72) target = $region12
      $region11: #{index_forward.1} parent=5 // pred_region
        %s76 = ssub.s32 %s10, 1
      $region12: #{index_forward.1} parent=5 // pred_fallthru
        _
      %p77 = scmp.lt.s32.totalorder %s10, 2
      // Predicated region
      $region13: #{index_forward.1} parent=5 // pred_check
        %p78 = pneg %p77
      $region14: #{index_forward.1} parent=5 // pred_check_branch
        %80 = sbr.rel (%p78) target = $region16
      $region15: #{index_forward.1} parent=5 // pred_region
        // Predicated region
        $region17: #{index_forward.1} parent=15 // pred_check
          %p81 = pneg %p30
        $region18: #{index_forward.1} parent=15 // pred_check_branch
          %83 = sbr.rel (%p81) target = $region20
        $region19: #{index_forward.1} parent=15 // pred_region
          %s84 = sand.u32 %s20, 1
          %s85 = scalar_lea.sflag [#allocation3], %s84
          %s86 = sand.u32 %s20, 1
          %s87 = smul.addr %s86, 64
          %s88 = scalar_lea.vmem [#allocation2], %s87
          %s89 = smul.u32 8, %s10
          %s91 = ssub.s32 1024, 1024
          %92 = vsyncadd %s85, %s91
          %s93 = smul.addr %s89, 128
          %s94 = scalar_lea.hbm %s0, %s93
          %s95 = sshll.u32 %s88, 4
          %s96 = int_to_ptr.vmem [resolvable:$true] %s95
          %101 = dma.hbm_to_vmem [thread:$0]  %s94, 1024, %s96, %s85, 128, 128, 8
        $region20: #{index_forward.1} parent=15 // pred_fallthru
          _
      $region16: #{index_forward.1} parent=5 // pred_fallthru
        _
      %p102 = scmp.le.s32.totalorder 1, %s10
      %p103 = scmp.lt.s32.totalorder %s10, 3
      %p104 = pnand %p102, %p103
      %p105 = pneg %p104
      // Predicated region
      $region21: #{index_forward.1} parent=5 // pred_check
        _
      $region22: #{index_forward.1} parent=5 // pred_check_branch
        %107 = sbr.rel (%p104) target = $region24
      $region23: #{index_forward.1} parent=5 // pred_region
        %s108 = ssub.s32 %s10, 1
        %s109 = sand.u32 %s23, 1
        %s110 = scalar_lea.sflag [#allocation3], %s109
        %s111 = sand.u32 %s23, 1
        %s112 = smul.addr %s111, 64
        %s113 = scalar_lea.vmem [#allocation2], %s112
        // Predicated region
        $region25: #{index_forward.1} parent=23 // pred_check
          %p114 = pneg %p36
        $region26: #{index_forward.1} parent=23 // pred_check_branch
          %116 = sbr.rel (%p114) target = $region28
        $region27: #{index_forward.1} parent=23 // pred_region
          %117 = dma.done %s110, 1024
        $region28: #{index_forward.1} parent=23 // pred_fallthru
          _
        %s118 = sand.u32 %s23, 1
        %s119 = scalar_lea.sflag [#allocation3], %s118
        %s120 = sand.u32 %s23, 1
        %s121 = smul.addr %s120, 64
        %s122 = scalar_lea.vmem [#allocation2], %s121
        %p123 = pneg %p36
        %p124 = pneg %p33
        %p125 = pneg %p62
        %p126 = pneg %p59
        %s127 = smul.u32 8, %s15
        %p128 = scmp.lt.s32.totalorder %s127, 15
        %s129 = scalar_select %p128, %s127, 15
        %s130 = smul.addr %s129, 8
        %s131 = scalar_lea.vmem %s1, %s130
        %s132 = smul.u32 8, %s15
        %s133 = smul.u32 8, %s15
        %p134 = scmp.lt.s32.totalorder %s133, 15
        %s135 = scalar_select %p134, %s133, 15
        %s136 = smul.addr %s135, 8
        %s137 = scalar_lea.vmem %s1, %s136
        %s138 = smul.u32 8, %s15
        %v139 = vld [vmem:[%s113] sm:$0xff]
        %v140 = vld [vmem:[%s113 + $0x8] sm:$0xff]
        %v141 = vld [vmem:[%s113 + $0x10] sm:$0xff]
        %v142 = vld [vmem:[%s113 + $0x18] sm:$0xff]
        %v143 = vld [vmem:[%s113 + $0x20] sm:$0xff]
        %v144 = vld [vmem:[%s113 + $0x28] sm:$0xff]
        %v145 = vld [vmem:[%s113 + $0x30] sm:$0xff]
        %v146 = vld [vmem:[%s113 + $0x38] sm:$0xff]
        %155 = vrot.lane.b32.xlu0 %v139, 124
        %v156 = vpop.permute.xlu0 %155
        %157 = vrot.lane.b32.xlu0 %v140, 124
        %v158 = vpop.permute.xlu0 %157
        %159 = vrot.lane.b32.xlu0 %v141, 124
        %v160 = vpop.permute.xlu0 %159
        %161 = vrot.lane.b32.xlu0 %v142, 124
        %v162 = vpop.permute.xlu0 %161
        %163 = vrot.lane.b32.xlu0 %v143, 124
        %v164 = vpop.permute.xlu0 %163
        %165 = vrot.lane.b32.xlu0 %v144, 124
        %v166 = vpop.permute.xlu0 %165
        %167 = vrot.lane.b32.xlu0 %v145, 124
        %v168 = vpop.permute.xlu0 %167
        %169 = vrot.lane.b32.xlu0 %v146, 124
        %v170 = vpop.permute.xlu0 %169
        %vm179 = vcmask 97280
        %180 = vst.msk [vmem:[%s137] sm:$0xff] %vm179, %v156
        %181 = vst.msk [vmem:[%s137 + $0x8] sm:$0xff] %vm179, %v158
        %182 = vst.msk [vmem:[%s137 + $0x10] sm:$0xff] %vm179, %v160
        %183 = vst.msk [vmem:[%s137 + $0x18] sm:$0xff] %vm179, %v162
        %184 = vst.msk [vmem:[%s137 + $0x20] sm:$0xff] %vm179, %v164
        %185 = vst.msk [vmem:[%s137 + $0x28] sm:$0xff] %vm179, %v166
        %186 = vst.msk [vmem:[%s137 + $0x30] sm:$0xff] %vm179, %v168
        %187 = vst.msk [vmem:[%s137 + $0x38] sm:$0xff] %vm179, %v170
        %s188 = smul.u32 8, %s15
        %p189 = scmp.lt.s32.totalorder %s188, 15
        %s190 = scalar_select %p189, %s188, 15
        %s191 = smul.addr %s190, 8
        %s192 = scalar_lea.vmem %s1, %s191
        // Predicated region
        $region29: #{index_forward.1} parent=23 // pred_check
          %p193 = pneg %p59
        $region30: #{index_forward.1} parent=23 // pred_check_branch
          %195 = sbr.rel (%p193) target = $region32
        $region31: #{index_forward.1} parent=23 // pred_region
          %s196 = smul.u32 8, %s15
        $region32: #{index_forward.1} parent=23 // pred_fallthru
          _
      $region24: #{index_forward.1} parent=5 // pred_fallthru
        _
      %p197 = scmp.le.s32.totalorder 2, %s10
      // Predicated region
      $region33: #{index_forward.1} parent=5 // pred_check
        %p198 = pneg %p197
      $region34: #{index_forward.1} parent=5 // pred_check_branch
        %200 = sbr.rel (%p198) target = $region36
      $region35: #{index_forward.1} parent=5 // pred_region
        %s201 = ssub.s32 %s10, 2
        // Predicated region
        $region37: #{index_forward.1} parent=35 // pred_check
          %p202 = pneg %p65
        $region38: #{index_forward.1} parent=35 // pred_check_branch
          %204 = sbr.rel (%p202) target = $region40
        $region39: #{index_forward.1} parent=35 // pred_region
          %s205 = smul.u32 8, %s16
          %p206 = scmp.lt.s32.totalorder %s205, 15
          %s207 = scalar_select %p206, %s205, 15
          %s208 = smul.addr %s207, 8
          %s209 = scalar_lea.vmem %s1, %s208
        $region40: #{index_forward.1} parent=35 // pred_fallthru
          _
      $region36: #{index_forward.1} parent=5 // pred_fallthru
        _
    $region6: #{index_forward.1} parent=1 // loop_footer
      %s14 = sadd.s32 1, %s10
    $region7: #{index_forward.1} parent=1 // loop_footer_branch
      %9 = sbr.rel target = $region3
    $region8: #{index_forward.1} parent=1 // loop_exit
      _
    %210 = vsyncpa [#allocation3], 1
    %s211 = scalar_lea.sflag [#allocation3], 1
    %212 = vsyncpa %s211, 1

</llo_original>
